<compile_context>
chip_gen: v7x
topology: tpu7x:2x2x1
jax: 0.10.0
libtpu: 0.0.40
codegen_flags: <defaults>
</compile_context>

<pallas_src>
import math

import jax
import jax.numpy as jnp
from jax.experimental import pallas as pl
from jax.experimental.pallas import tpu as pltpu


def _swap_kernel(dim_ref, base_ref, source_ref, out_ref):
    # dim_ref: SMEM scalar-prefetch ref holding interchange_dim (int32, shape (1,))
    # base_ref / source_ref / out_ref: (tm, width) VMEM tiles
    d = dim_ref[0]
    width = base_ref.shape[-1]
    lane_idx = jax.lax.broadcasted_iota(jnp.int32, (1, width), 1)
    mask = lane_idx < d                      # (1, width), broadcast over sublanes
    out_ref[...] = jnp.where(mask, source_ref[...], base_ref[...])


def vanilla_intervention(base, source, interchange_dim):
    """out = base with out[..., :interchange_dim] = source[..., :interchange_dim].

    base, source: (..., embed_dim), same shape & dtype.
    interchange_dim: python int (static) or int32 scalar (dynamic).
    """
    assert base.shape == source.shape
    assert base.dtype == source.dtype
    orig_shape = base.shape
    emb = orig_shape[-1]
    rows = math.prod(orig_shape[:-1]) if len(orig_shape) > 1 else 1

    # Is interchange_dim a compile-time constant?
    try:
        static_d = int(interchange_dim)
    except Exception:  # traced value -> dynamic path
        static_d = None

    if static_d is not None:
        if static_d <= 0:
            return base                      # no-op swap
        if static_d >= emb:
            return source                    # whole-vector swap == source
        # Only the first ceil(d/128)*128 lane columns need to be touched; the
        # rest of the output stays = base via the input/output alias.
        width = min(pl.cdiv(static_d, 128) * 128, emb)
    else:
        width = emb                          # dynamic d -> full width

    base2 = base.reshape(rows, emb)
    source2 = source.reshape(rows, emb)

    itemsize = jnp.dtype(base.dtype).itemsize
    min_sub = max(8, 32 // max(1, itemsize))     # 8 f32 / 16 bf16 / 32 int8,fp8

    # Row tile: ~2 MiB per operand block (3 arrays x 2 pipeline buffers ~= 12 MiB
    # of live VMEM), clamped to the (sublane-rounded) row count.
    target_block_bytes = 2 * 1024 * 1024
    tm = max(min_sub, target_block_bytes // max(1, width * itemsize))
    tm -= tm % min_sub
    tm = min(tm, pl.cdiv(rows, min_sub) * min_sub)
    tm = max(tm, min_sub)

    grid = (pl.cdiv(rows, tm),)
    dim_arr = jnp.asarray([interchange_dim], dtype=jnp.int32)

    grid_spec = pltpu.PrefetchScalarGridSpec(
        num_scalar_prefetch=1,
        grid=grid,
        in_specs=[
            pl.BlockSpec((tm, width), lambda i, dim: (i, 0)),   # base
            pl.BlockSpec((tm, width), lambda i, dim: (i, 0)),   # source
        ],
        out_specs=pl.BlockSpec((tm, width), lambda i, dim: (i, 0)),
    )

    cost = pl.CostEstimate(
        flops=0,
        transcendentals=0,
        bytes_accessed=3 * rows * width * itemsize,
    )

    out2 = pl.pallas_call(
        _swap_kernel,
        out_shape=jax.ShapeDtypeStruct((rows, emb), base.dtype),
        grid_spec=grid_spec,
        compiler_params=pltpu.CompilerParams(
            dimension_semantics=("parallel",),
            vmem_limit_bytes=48 * 1024 * 1024,
        ),
        cost_estimate=cost,
        # base2 aliases the output; operand index 1 accounts for the
        # scalar-prefetch arg (dim_arr) being operand 0.
        input_output_aliases={1: 0},
    )(dim_arr, base2, source2)

    return out2.reshape(orig_shape)


# TODO(synk): the `subspaces`/`subspace_partition` branch of
# _do_intervention_by_swap (scatter into arbitrary partition index lists) is
# not implemented here; only the default interchange_dim prefix swap is.


if __name__ == "__main__":
    key = jax.random.PRNGKey(0)
    k1, k2, k3, k4 = jax.random.split(key, 4)

    fn = jax.jit(vanilla_intervention, static_argnums=2)

    # Case 1: f32, small hidden (VanillaIntervention.set_interchange_dim(16)).
    batch, seq, hidden = 2, 8, 32
    d = 16
    base = jax.random.normal(k1, (batch, seq, hidden), dtype=jnp.float32)
    source = jax.random.normal(k2, (batch, seq, hidden), dtype=jnp.float32)
    out = jax.block_until_ready(fn(base, source, d))
    ref = base.at[..., :d].set(source[..., :d])
    assert jnp.array_equal(out, ref), "case1 mismatch vs reference"

    # Case 2: exercises the column-restricted path (width=128 < hidden=160),
    # a partial last row block (rows=15), and the base->output alias.
    batch, seq, hidden = 3, 5, 160
    d = 100
    base = jax.random.normal(k3, (batch, seq, hidden), dtype=jnp.float32)
    source = jax.random.normal(k4, (batch, seq, hidden), dtype=jnp.float32)
    out = jax.block_until_ready(fn(base, source, d))
    ref = base.at[..., :d].set(source[..., :d])
    assert jnp.array_equal(out, ref), "case2 mismatch vs reference"

    # Case 3: bf16 (dtype-aware 16-row sublane tile).
    base16 = base[..., :32].astype(jnp.bfloat16)
    source16 = source[..., :32].astype(jnp.bfloat16)
    out16 = jax.block_until_ready(fn(base16, source16, 16))
    ref16 = base16.at[..., :16].set(source16[..., :16])
    assert jnp.array_equal(out16, ref16), "case3 mismatch vs reference"

    print("KERNEL_OK")
</pallas_src>

<mosaic_0001>
module attributes {stable_mosaic.version = 11 : i64} {
  func.func @_swap_kernel(%arg0: i32, %arg1: memref<1xi32, #tpu.memory_space<smem>>, %arg2: memref<16x32xf32, #tpu.memory_space<vmem>>, %arg3: memref<16x32xf32, #tpu.memory_space<vmem>>, %arg4: memref<16x32xf32, #tpu.memory_space<vmem>>) attributes {dimension_semantics = [#tpu.dimension_semantics<parallel>], iteration_bounds = array<i64: 1>, scalar_prefetch = 1 : i64, scratch_operands = 0 : i64, tpu.core_type = #tpu.core_type<tc>, window_params = [{transform_indices = @transform_0, window_bounds = array<i64: 16, 32>}, {transform_indices = @transform_1, window_bounds = array<i64: 16, 32>}, {transform_indices = @transform_2, window_bounds = array<i64: 16, 32>}]} {
    %c0 = arith.constant 0 : index
    %0 = memref.load %arg1[%c0] : memref<1xi32, #tpu.memory_space<smem>>
    %1 = tpu.iota {dimensions = array<i32: 1>} : vector<1x32xi32>
    %2 = vector.broadcast %0 : i32 to vector<1x32xi32>
    %3 = arith.cmpi slt, %1, %2 : vector<1x32xi32>
    %c0_0 = arith.constant 0 : index
    %c0_1 = arith.constant 0 : index
    %4 = vector.load %arg3[%c0_0, %c0_1] : memref<16x32xf32, #tpu.memory_space<vmem>>, vector<16x32xf32>
    %c0_2 = arith.constant 0 : index
    %c0_3 = arith.constant 0 : index
    %5 = vector.load %arg2[%c0_2, %c0_3] : memref<16x32xf32, #tpu.memory_space<vmem>>, vector<16x32xf32>
    %6 = vector.shape_cast %3 : vector<1x32xi1> to vector<1x32xi1>
    %7 = vector.broadcast %6 : vector<1x32xi1> to vector<16x32xi1>
    %8 = arith.select %7, %4, %5 : vector<16x32xi1>, vector<16x32xf32>
    %c0_4 = arith.constant 0 : index
    %c0_5 = arith.constant 0 : index
    %9 = vector.load %arg4[%c0_4, %c0_5] : memref<16x32xf32, #tpu.memory_space<vmem>>, vector<16x32xf32>
    tpu.vector_store %arg4[%c0_4, %c0_5], %8 {strides = array<i32>} : memref<16x32xf32, #tpu.memory_space<vmem>>, vector<16x32xf32>,
    return
  }
  func.func @transform_0(%arg0: i32, %arg1: memref<1xi32, #tpu.memory_space<smem>>) -> (i32, i32) {
    %c0_i32 = arith.constant 0 : i32
    %c0_i32_0 = arith.constant 0 : i32
    return %arg0, %c0_i32 : i32, i32
  }
  func.func @transform_1(%arg0: i32, %arg1: memref<1xi32, #tpu.memory_space<smem>>) -> (i32, i32) {
    %c0_i32 = arith.constant 0 : i32
    %c0_i32_0 = arith.constant 0 : i32
    return %arg0, %c0_i32 : i32, i32
  }
  func.func @transform_2(%arg0: i32, %arg1: memref<1xi32, #tpu.memory_space<smem>>) -> (i32, i32) {
    %c0_i32 = arith.constant 0 : i32
    %c0_i32_0 = arith.constant 0 : i32
    return %arg0, %c0_i32 : i32, i32
  }
}

</mosaic_0001>

<llo_original>
// kernel: vanilla_intervention.1
$region0: #{vanilla_intervention.1}
  #allocation0 [shape = 'u32[]', space=smem, size = 0x4, offset = 0x4, fixed_abs, tag = 'smem constant byte address 0x4 - core index']
  #allocation1 [shape = 'u32[144,128]{1,0:T(1,128)}', space=vmem, size = 0x12000, scoped, tag = 'internal scratch']
  #allocation2 [shape = 's32[1]{0}', space=sflag, size = 0x4, scoped, tag = 'scoped memory for vanilla_intervention.1']
  #allocation3 [shape = 's32[1]{0:T(128)S(6)}', space=smem, size = 0x200, scoped, tag = 'prefetched SMEM operand 0']
  %s0 = inlined_call_operand.<no memory space> [shape: s32[1], index: 0, kind: input, shape index: {}]
  %s1 = inlined_call_operand.vmem [shape: f32[16,32], index: 1, kind: input, shape index: {}, may-alias: {1,3}]
  %s2 = inlined_call_operand.vmem [shape: f32[16,32], index: 2, kind: input, shape index: {}]
  %s3 = inlined_call_operand.vmem [shape: f32[16,32], index: 3, kind: output, shape index: {}, may-alias: {1,3}]
  %s4 = sld [smem:[#allocation0]]
  $region18: #{vanilla_intervention.1} parent=0
    _
  %s6 = ssub.s32 1, %s4
  %s7 = scalar_select 0, %s6, %s4
  %8 = sst [smem:[#allocation3]] %s0
  // Predicated region
  $region2: #{vanilla_intervention.1} parent=0 // pred_check
    _
  $region3: #{vanilla_intervention.1} parent=0 // pred_check_branch
    %10 = sbr.rel (0) target = $region5
  $region4: #{vanilla_intervention.1} parent=0 // pred_region
    _
  $region5: #{vanilla_intervention.1} parent=0 // pred_fallthru
    _
  // Predicated region
  $region6: #{vanilla_intervention.1} parent=0 // pred_check
    _
  $region7: #{vanilla_intervention.1} parent=0 // pred_check_branch
    %12 = sbr.rel (0) target = $region9
  $region8: #{vanilla_intervention.1} parent=0 // pred_region
    _
  $region9: #{vanilla_intervention.1} parent=0 // pred_fallthru
    _
  %s13 = sld [smem:[#allocation3]]
  %v14 = vlaneseq
  %v15 = vand.u32 %v14, 127
  %v16 = vstv %s13
  %vm17 = vcmp.lt.s32.totalorder %v15, %v16
  %v18 = vld [vmem:[%s2] sm:$0xff]
  %v19 = vld [vmem:[%s2 + $0x8] sm:$0xff]
  %v20 = vld [vmem:[%s1] sm:$0xff]
  %v21 = vld [vmem:[%s1 + $0x8] sm:$0xff]
  %v22 = vsel %vm17, 1, 0
  %vm23 = vcmp.eq.s32.totalorder %v22, 1
  %v24 = vsel %vm23, %v18, %v20
  %v25 = vsel %vm23, %v19, %v21
  %vm26 = vcmask 261120
  %27 = vst.msk [vmem:[%s3] sm:$0xff] %vm26, %v24
  %28 = vst.msk [vmem:[%s3 + $0x8] sm:$0xff] %vm26, %v25
  // Predicated region
  $region10: #{vanilla_intervention.1} parent=0 // pred_check
    _
  $region11: #{vanilla_intervention.1} parent=0 // pred_check_branch
    %30 = sbr.rel (0) target = $region13
  $region12: #{vanilla_intervention.1} parent=0 // pred_region
    _
  $region13: #{vanilla_intervention.1} parent=0 // pred_fallthru
    _
  // Predicated region
  $region14: #{vanilla_intervention.1} parent=0 // pred_check
    _
  $region15: #{vanilla_intervention.1} parent=0 // pred_check_branch
    %32 = sbr.rel (0) target = $region17
  $region16: #{vanilla_intervention.1} parent=0 // pred_region
    _
  $region17: #{vanilla_intervention.1} parent=0 // pred_fallthru
    _

</llo_original>
